<compile_context>
chip_gen: v7x
topology: tpu7x:2x2x1
jax: 0.10.0
libtpu: 0.0.40
codegen_flags: <defaults>
</compile_context>

<pallas_src>
import functools
import math

import jax
import jax.numpy as jnp
from jax.experimental import pallas as pl
from jax.experimental.pallas import tpu as pltpu


# ---------------- Pallas kernel ----------------
def _pe_kernel(x_ref, pe_ref, o_ref, *, scale):
    # x_ref : (tile_r, tile_c) x.dtype   — lane-dense tile of the (B, L*D) slab
    # pe_ref: (1, tile_c)      f32       — matching tile of flattened pe, bcast over rows
    # o_ref : (tile_r, tile_c) x.dtype
    xv = x_ref[...].astype(jnp.float32)
    o_ref[...] = (xv * scale + pe_ref[...]).astype(o_ref.dtype)


def _pick_tile(total, align, max_tile):
    """Largest multiple of `align` that divides `total`, capped at `max_tile`.
    Falls back to `total` itself (a full-extent block is always legal)."""
    t = (max_tile // align) * align
    while t >= align:
        if total % t == 0:
            return t
        t -= align
    return total


# ---------------- module "init": build pe once, pre-flattened ----------------
def make_pe(max_len, d_model):
    assert d_model % 2 == 0, "PositionalEncoding requires an even d_model"
    pos = jnp.arange(max_len, dtype=jnp.float32)[:, None]
    div = jnp.exp(jnp.arange(0, d_model, 2, dtype=jnp.float32)
                  * (-math.log(10000.0) / d_model))
    pe = jnp.zeros((max_len, d_model), jnp.float32)
    pe = pe.at[:, 0::2].set(jnp.sin(pos * div))
    pe = pe.at[:, 1::2].set(jnp.cos(pos * div))
    return pe                                  # (max_len, d_model) f32


# ---------------- forward ----------------
def positional_encoding_pallas(x, pe_flat, *, d_model, min_pallas_elems=1 << 20):
    """x: (B, L, D), pe_flat: (1, max_len*D) f32 (built once at init) -> (B, L, D).

    Preserves x's dtype (f32 or bf16). Dispatches to plain jnp below
    `min_pallas_elems` elements, where the pallas_call would be pure overhead.
    """
    B, L, D = x.shape
    assert D == d_model
    LD = L * D
    assert LD <= pe_flat.shape[1], "sequence longer than the registered pe buffer"
    scale = float(math.sqrt(D))

    # Tiny shapes (or lane count not 128-aligned): plain jnp — fuses with the
    # producer and avoids ~1-2 us of fixed custom-call overhead per step.
    if (B * LD < min_pallas_elems) or (LD % 128 != 0):
        pe_slice = pe_flat[:, :LD].reshape(1, L, D)
        return (x.astype(jnp.float32) * scale + pe_slice).astype(x.dtype)

    x2 = x.reshape(B, LD)                      # lane-dense slab, free reshape

    # Tile sizes: lane-dense (>=128, up to 2048 lanes), up to 256 rows.
    # Pipeline VMEM ~= 2*(x_tile + out_tile) + 2*pe_tile <= ~8 MiB f32,
    # comfortably inside v7x's 32 MiB scoped default (and v5e/v6e's 128 MiB).
    tile_r = _pick_tile(B, 8, 256)
    tile_c = _pick_tile(LD, 128, 2048)
    grid = (B // tile_r, LD // tile_c)

    itemsize = jnp.dtype(x.dtype).itemsize
    cost = pl.CostEstimate(
        flops=2 * B * LD,                      # one mul + one add per element
        transcendentals=0,
        bytes_accessed=2 * B * LD * itemsize + LD * 4,   # x in, out, pe rows used
    )

    out = pl.pallas_call(
        functools.partial(_pe_kernel, scale=scale),
        out_shape=jax.ShapeDtypeStruct((B, LD), x.dtype),
        grid=grid,
        in_specs=[
            pl.BlockSpec((tile_r, tile_c), lambda i, j: (i, j)),
            # full pe buffer passed; BlockSpec DMAs only the tiles we touch,
            # so no per-call slice/reshape copy of pe.
            pl.BlockSpec((1, tile_c), lambda i, j: (0, j)),
        ],
        out_specs=pl.BlockSpec((tile_r, tile_c), lambda i, j: (i, j)),
        compiler_params=pltpu.CompilerParams(
            dimension_semantics=("parallel", "parallel")),
        cost_estimate=cost,
    )(x2, pe_flat)
    return out.reshape(B, L, D)


# ---------------- pure-JAX reference ----------------
def positional_encoding_ref(x, pe):
    B, L, D = x.shape
    return x * math.sqrt(D) + pe[None, :L, :]


if __name__ == "__main__":
    key = jax.random.PRNGKey(0)

    B, L, D_MODEL, MAX_LEN = 2, 8, 32, 64

    # "Module init": build pe once and keep the flattened view around.
    pe = make_pe(MAX_LEN, D_MODEL)                       # (max_len, D) f32
    pe_flat = pe.reshape(1, MAX_LEN * D_MODEL)           # built once, reused per call

    x = jax.random.normal(key, (B, L, D_MODEL), dtype=jnp.float32)

    # --- Pallas path (force it at these tiny demo shapes) ---
    fwd = jax.jit(functools.partial(positional_encoding_pallas,
                                    d_model=D_MODEL, min_pallas_elems=0))
    y = fwd(x, pe_flat)
    jax.block_until_ready(y)

    y_ref = positional_encoding_ref(x, pe)
    assert y.shape == (B, L, D_MODEL), y.shape
    assert not bool(jnp.isnan(y).any())
    assert bool(jnp.allclose(y, y_ref, atol=1e-5, rtol=1e-5))

    # --- bf16 I/O path (kernel upcasts internally, halves HBM traffic) ---
    xb = x.astype(jnp.bfloat16)
    yb = fwd(xb, pe_flat)
    jax.block_until_ready(yb)
    yb_ref = (xb.astype(jnp.float32) * math.sqrt(D_MODEL)
              + pe[None, :L, :]).astype(jnp.bfloat16)
    assert yb.dtype == jnp.bfloat16
    assert bool(jnp.allclose(yb.astype(jnp.float32), yb_ref.astype(jnp.float32),
                             atol=5e-2, rtol=5e-2))

    # --- default dispatch: tiny shapes take the fused jnp path, same numerics ---
    y_small = jax.jit(functools.partial(positional_encoding_pallas,
                                        d_model=D_MODEL))(x, pe_flat)
    assert bool(jnp.allclose(y_small, y_ref, atol=1e-5, rtol=1e-5))

    print("KERNEL_OK")
</pallas_src>

<mosaic_0001>
module attributes {stable_mosaic.version = 11 : i64} {
  func.func @_pe_kernel(%arg0: i32, %arg1: i32, %arg2: memref<2x256xf32, #tpu.memory_space<vmem>>, %arg3: memref<1x256xf32, #tpu.memory_space<vmem>>, %arg4: memref<2x256xf32, #tpu.memory_space<vmem>>) attributes {dimension_semantics = [#tpu.dimension_semantics<parallel>, #tpu.dimension_semantics<parallel>], iteration_bounds = array<i64: 1, 1>, scalar_prefetch = 0 : i64, scratch_operands = 0 : i64, tpu.core_type = #tpu.core_type<tc>, window_params = [{transform_indices = @transform_0, window_bounds = array<i64: 2, 256>}, {transform_indices = @transform_1, window_bounds = array<i64: 1, 256>}, {transform_indices = @transform_2, window_bounds = array<i64: 2, 256>}]} {
    %c0 = arith.constant 0 : index
    %c0_0 = arith.constant 0 : index
    %0 = vector.load %arg2[%c0, %c0_0] : memref<2x256xf32, #tpu.memory_space<vmem>>, vector<2x256xf32>
    %cst = arith.constant 5.65685415 : f32
    %1 = vector.broadcast %cst : f32 to vector<2x256xf32>
    %2 = arith.mulf %0, %1 : vector<2x256xf32>
    %c0_1 = arith.constant 0 : index
    %c0_2 = arith.constant 0 : index
    %3 = vector.load %arg3[%c0_1, %c0_2] : memref<1x256xf32, #tpu.memory_space<vmem>>, vector<1x256xf32>
    %4 = vector.broadcast %3 : vector<1x256xf32> to vector<2x256xf32>
    %5 = arith.addf %2, %4 : vector<2x256xf32>
    %c0_3 = arith.constant 0 : index
    %c0_4 = arith.constant 0 : index
    %6 = vector.load %arg4[%c0_3, %c0_4] : memref<2x256xf32, #tpu.memory_space<vmem>>, vector<2x256xf32>
    tpu.vector_store %arg4[%c0_3, %c0_4], %5 {strides = array<i32>} : memref<2x256xf32, #tpu.memory_space<vmem>>, vector<2x256xf32>,
    return
  }
  func.func @transform_0(%arg0: i32, %arg1: i32) -> (i32, i32) {
    %c0_i32 = arith.constant 0 : i32
    return %arg0, %arg1 : i32, i32
  }
  func.func @transform_1(%arg0: i32, %arg1: i32) -> (i32, i32) {
    %c0_i32 = arith.constant 0 : i32
    %c0_i32_0 = arith.constant 0 : i32
    return %c0_i32, %arg1 : i32, i32
  }
  func.func @transform_2(%arg0: i32, %arg1: i32) -> (i32, i32) {
    %c0_i32 = arith.constant 0 : i32
    return %arg0, %arg1 : i32, i32
  }
}

</mosaic_0001>

<llo_original>
// kernel: positional_encoding_pallas.1
$region0: #{positional_encoding_pallas.1}
  #allocation0 [shape = 'u32[]', space=smem, size = 0x4, offset = 0x4, fixed_abs, tag = 'smem constant byte address 0x4 - core index']
  #allocation1 [shape = 'u32[144,128]{1,0:T(1,128)}', space=vmem, size = 0x12000, scoped, tag = 'internal scratch']
  %s0 = inlined_call_operand.vmem [shape: f32[2,256], index: 0, kind: input, shape index: {}]
  %s1 = inlined_call_operand.vmem [shape: f32[1,2048], index: 1, kind: input, shape index: {}]
  %s2 = inlined_call_operand.vmem [shape: f32[2,256], index: 2, kind: output, shape index: {}]
  %s3 = sld [smem:[#allocation0]]
  $region18: #{positional_encoding_pallas.1} parent=0
    _
  %s5 = ssub.s32 1, %s3
  %s6 = scalar_select 0, %s5, %s3
  // Predicated region
  $region2: #{positional_encoding_pallas.1} parent=0 // pred_check
    _
  $region3: #{positional_encoding_pallas.1} parent=0 // pred_check_branch
    %8 = sbr.rel (0) target = $region5
  $region4: #{positional_encoding_pallas.1} parent=0 // pred_region
    _
  $region5: #{positional_encoding_pallas.1} parent=0 // pred_fallthru
    _
  // Predicated region
  $region6: #{positional_encoding_pallas.1} parent=0 // pred_check
    _
  $region7: #{positional_encoding_pallas.1} parent=0 // pred_check_branch
    %10 = sbr.rel (0) target = $region9
  $region8: #{positional_encoding_pallas.1} parent=0 // pred_region
    _
  $region9: #{positional_encoding_pallas.1} parent=0 // pred_fallthru
    _
  %v11 = vld [vmem:[%s0] sm:$0xf]
  %v12 = vmul.f32 %v11, 5.656854
  %v13 = vld [vmem:[%s1] sm:$0x3]
  %v15 = vlaneseq
  %v16 = vshrl.u32 %v15, 7
  %v17 = vsub.s32 0, %v16
  %v18 = vrot.slane %v13, %v17
  %v19 = vlaneseq
  %v20 = vshrl.u32 %v19, 7
  %v21 = vsub.s32 1, %v20
  %v22 = vrot.slane %v13, %v21
  %v23 = vcombine.low %v18, %v22
  %v25 = vunpack.c.l.s4 1983009808
  %v26 = vunpack.c.0.s8 %v25
  %v27 = vlaneseq
  %v28 = vshrl.u32 %v27, 7
  %v29 = vsub.s32 %v26, %v28
  %v30 = vrot.slane %v23, %v29
  %v32 = vadd.f32 %v12, %v30
  %33 = vst [vmem:[%s2] sm:$0xf] %v32
  // Predicated region
  $region10: #{positional_encoding_pallas.1} parent=0 // pred_check
    _
  $region11: #{positional_encoding_pallas.1} parent=0 // pred_check_branch
    %35 = sbr.rel (0) target = $region13
  $region12: #{positional_encoding_pallas.1} parent=0 // pred_region
    _
  $region13: #{positional_encoding_pallas.1} parent=0 // pred_fallthru
    _
  // Predicated region
  $region14: #{positional_encoding_pallas.1} parent=0 // pred_check
    _
  $region15: #{positional_encoding_pallas.1} parent=0 // pred_check_branch
    %37 = sbr.rel (0) target = $region17
  $region16: #{positional_encoding_pallas.1} parent=0 // pred_region
    _
  $region17: #{positional_encoding_pallas.1} parent=0 // pred_fallthru
    _

</llo_original>
